<compile_context>
chip_gen: v5e
topology: v5e:2x2
jax: 0.10.0
libtpu: 0.0.40
codegen_flags: <defaults>
</compile_context>

<pallas_src>
import functools
import math

import jax
import jax.numpy as jnp
from jax.experimental import pallas as pl
from jax.experimental.pallas import tpu as pltpu

MIN_NORM = 1e-15          # PoincareBall.min_norm
ARTANH_CLAMP = 1e-7       # f32-safe artanh clamp (torch clamps at 1e-15 but computes in f64)
EPS_F32 = 1e-7            # self.eps[torch.float32]
_LANE = 128
_SUBLANE = 8


def _round_up(a, b):
    return (a + b - 1) // b * b


def _vmem_capacity_bytes():
    """Best-effort physical VMEM query; fall back to the v7x-safe 64 MiB."""
    try:
        info = pltpu.get_tpu_info()
        cap = getattr(info, "vmem_capacity_bytes", None)
        if cap:
            return int(cap)
    except Exception:
        pass
    return 64 * 1024 * 1024


# ----------------------------- kernels ------------------------------------- #

def _mass_kernel(x_ref, w_ref, b_ref, mass_ref, *, c, act):
    """logmap0 + proj_tan0 + linear(OUT=1) + act for one tile of nodes.

    h = scale * sum(x * w, -1) + b with scale = artanh(sqrt(c)*||x||) / (sqrt(c)*||x||),
    so both reductions come from one pass over the x tile (VPU mul + XLU lane reduce,
    no MXU needed for an OUT=1 matvec).
    """
    x = x_ref[...].astype(jnp.float32)                      # (tile_n, D)
    w = w_ref[...].astype(jnp.float32)                      # (1, D)
    b = b_ref[0].astype(jnp.float32)                        # scalar bias from SMEM
    sqrt_c = float(c) ** 0.5

    sq = jnp.sum(x * x, axis=-1, keepdims=True)             # (tile_n, 1)
    xw = jnp.sum(x * w, axis=-1, keepdims=True)             # (tile_n, 1)

    norm = jnp.maximum(jnp.sqrt(sq), MIN_NORM)
    z = jnp.clip(sqrt_c * norm, -(1.0 - ARTANH_CLAMP), 1.0 - ARTANH_CLAMP)
    artanh = 0.5 * jnp.log((1.0 + z) / (1.0 - z))
    scale = artanh / (sqrt_c * norm)                        # proj_tan0 == identity

    h = scale * xw + b
    mass_ref[...] = act(h).astype(mass_ref.dtype)


def _probs_kernel(mg_ref, dist_ref, probs_ref, *, beta, lamb, eps):
    """probs = sigmoid(beta * mass[idx[:,1]] - lamb * log(dist + eps)) on a dense tile.

    sigmoid expressed exactly via tanh: 2 EUP pushes/elem (log + tanh) instead of 3.
    """
    mg = mg_ref[...].astype(jnp.float32)                    # (tile_r, 128)
    dist = dist_ref[...].astype(jnp.float32)                # (tile_r, 128)
    logit = beta * mg - lamb * jnp.log(dist + eps)
    probs_ref[...] = (0.5 * (1.0 + jnp.tanh(0.5 * logit))).astype(probs_ref.dtype)


# ----------------------------- wrapper -------------------------------------- #

def gravity_decoder(x, idx, dist, weight, bias, *, c, beta, lamb,
                    act=jax.nn.relu, tile_n=None):
    """x: (N, D) f32 (points inside the Poincare ball), idx: (E, 2) i32, dist: (E,) f32,
       weight: (D, 1) f32, bias: (1,) f32.  Returns (probs (E,) f32, mass (N, 1))."""
    N, D = x.shape
    OUT = weight.shape[1]
    assert OUT == 1, "GravityDecoder's probs formula requires out_features == 1"
    E = idx.shape[0]

    # Generation-aware VMEM budgets: v5e/v6e (128 MiB) can afford 2x the v7x (64 MiB) block.
    vmem_cap = _vmem_capacity_bytes()
    big_vmem = vmem_cap >= 100 * 1024 * 1024
    x_block_budget = (8 if big_vmem else 4) * 1024 * 1024   # per x block (double-buffered)
    vmem_limit = (96 if big_vmem else 48) * 1024 * 1024

    # ---- stage 1: mass = act(logmap0(x) @ W + b), tiled over nodes --------- #
    if tile_n is None:
        tile_n = max(_SUBLANE, (x_block_budget // (D * 4) // _SUBLANE) * _SUBLANE)
    # Keep >= 2 grid steps when possible so v7x's two TensorCores both get work.
    tile_n = max(_SUBLANE, min(tile_n, _round_up(pl.cdiv(N, 2), _SUBLANE)))
    grid_n = pl.cdiv(N, tile_n)                             # partial last block: no x copy

    mass = pl.pallas_call(
        functools.partial(_mass_kernel, c=c, act=act),
        out_shape=jax.ShapeDtypeStruct((N, 1), x.dtype),
        grid=(grid_n,),
        in_specs=[
            pl.BlockSpec((tile_n, D), lambda i: (i, 0)),
            pl.BlockSpec((1, D), lambda i: (0, 0)),
            pl.BlockSpec(memory_space=pltpu.MemorySpace.SMEM),   # scalar bias
        ],
        out_specs=pl.BlockSpec((tile_n, 1), lambda i: (i, 0)),
        compiler_params=pltpu.CompilerParams(
            dimension_semantics=("parallel",),
            vmem_limit_bytes=vmem_limit),
    )(x, weight.reshape(1, D).astype(x.dtype), bias.reshape(1).astype(jnp.float32))

    # ---- glue: data-dependent row gather mass[idx[:, 1]] -------------------- #
    # Pad the (cheap, int32) index vector and gather straight into the lane-dense
    # (rows, 128) layout so XLA emits one fusion (no separate mg intermediate).
    # TODO(synk): fuse this gather into _probs_kernel (mass kept VMEM-resident + in-kernel
    # jnp.take) once Pallas TPU lowers general 1-D table gathers; current lowering only
    # covers take_along_axis-shaped gathers.
    E_pad = _round_up(E, _LANE)
    rows = E_pad // _LANE
    idx_col = jnp.pad(idx[:, 1].astype(jnp.int32), (0, E_pad - E))          # valid pad index
    mg2 = jnp.take(mass[:, 0], idx_col, axis=0).reshape(rows, _LANE)
    dist2 = jnp.pad(dist, (0, E_pad - E), constant_values=1.0).reshape(rows, _LANE)

    # ---- stage 2: probs, lane+sublane dense (rows, 128) streaming kernel ---- #
    tile_r = max(_SUBLANE, min(2048, _round_up(pl.cdiv(rows, 2), _SUBLANE)))
    grid_r = pl.cdiv(rows, tile_r)

    probs2 = pl.pallas_call(
        functools.partial(_probs_kernel, beta=beta, lamb=lamb, eps=EPS_F32),
        out_shape=jax.ShapeDtypeStruct((rows, _LANE), jnp.float32),
        grid=(grid_r,),
        in_specs=[
            pl.BlockSpec((tile_r, _LANE), lambda i: (i, 0)),
            pl.BlockSpec((tile_r, _LANE), lambda i: (i, 0)),
        ],
        out_specs=pl.BlockSpec((tile_r, _LANE), lambda i: (i, 0)),
        compiler_params=pltpu.CompilerParams(dimension_semantics=("parallel",)),
    )(mg2, dist2)

    probs = probs2.reshape(rows * _LANE)[:E]
    return probs, mass


# ----------------------------- reference (pure JAX) -------------------------- #

def _reference(x, idx, dist, weight, bias, *, c, beta, lamb, act=jax.nn.relu):
    sqrt_c = c ** 0.5
    norm = jnp.maximum(jnp.linalg.norm(x, axis=-1, keepdims=True), MIN_NORM)
    z = jnp.clip(sqrt_c * norm, -(1.0 - ARTANH_CLAMP), 1.0 - ARTANH_CLAMP)
    x_tan = (jnp.arctanh(z) / (sqrt_c * norm)) * x
    h = x_tan @ weight + bias
    mass = act(h)
    mg = mass[idx[:, 1], 0]
    probs = jax.nn.sigmoid(beta * mg - lamb * jnp.log(dist + EPS_F32))
    return probs, mass


# ----------------------------- main ------------------------------------------ #

if __name__ == "__main__":
    N, D, OUT, E = 256, 128, 1, 256     # nodes, in_features, out_features, edges
    c, beta, lamb = 1.0, 1.0, 1.0

    key = jax.random.PRNGKey(0)
    kx, kw, kb, ki, kd = jax.random.split(key, 5)

    # Points must lie inside the Poincare ball (||x|| < 1/sqrt(c)): the torch module
    # receives manifold points, so generate valid ones (||x|| <= 0.9 here).
    v = jax.random.normal(kx, (N, D), dtype=jnp.float32)
    x = 0.9 * v / (1.0 + jnp.linalg.norm(v, axis=-1, keepdims=True))

    # nn.Linear-style init (uniform in +-1/sqrt(in_features))
    bound = 1.0 / math.sqrt(D)
    weight = jax.random.uniform(kw, (D, OUT), minval=-bound, maxval=bound, dtype=jnp.float32)
    bias = jax.random.uniform(kb, (OUT,), minval=-bound, maxval=bound, dtype=jnp.float32)
    idx = jax.random.randint(ki, (E, 2), 0, N, dtype=jnp.int32)
    dist = jax.random.uniform(kd, (E,), minval=0.1, maxval=5.0, dtype=jnp.float32)

    probs, mass = gravity_decoder(x, idx, dist, weight, bias, c=c, beta=beta, lamb=lamb)
    jax.block_until_ready((probs, mass))

    probs_ref, mass_ref = _reference(x, idx, dist, weight, bias, c=c, beta=beta, lamb=lamb)

    assert mass.shape == (N, OUT) and probs.shape == (E,)
    assert bool(jnp.all(jnp.isfinite(mass))) and bool(jnp.all(jnp.isfinite(probs)))
    assert jnp.allclose(mass, mass_ref, atol=2e-5, rtol=2e-5)
    # exact (tanh-form) sigmoid in-kernel -> tight probs tolerance
    assert jnp.allclose(probs, probs_ref, atol=5e-5, rtol=5e-5)

    print("KERNEL_OK")
</pallas_src>

<mosaic_0001>
module attributes {stable_mosaic.version = 11 : i64} {
  func.func @_mass_kernel(%arg0: i32, %arg1: memref<128x128xf32, #tpu.memory_space<vmem>>, %arg2: memref<1x128xf32, #tpu.memory_space<vmem>>, %arg3: memref<1xf32, #tpu.memory_space<smem>>, %arg4: memref<128x1xf32, #tpu.memory_space<vmem>>) attributes {dimension_semantics = [#tpu.dimension_semantics<parallel>], iteration_bounds = array<i64: 2>, scalar_prefetch = 0 : i64, scratch_operands = 0 : i64, tpu.core_type = #tpu.core_type<tc>, window_params = [{transform_indices = @transform_0, window_bounds = array<i64: 128, 128>}, {pipeline_mode = #tpu.pipeline_mode<synchronous>, transform_indices = @transform_1, window_bounds = array<i64: 1, 128>}, {transform_indices = @transform_2, window_bounds = array<i64: 1>}, {transform_indices = @transform_3, window_bounds = array<i64: 128, 1>}]} {
    %c0 = arith.constant 0 : index
    %c0_0 = arith.constant 0 : index
    %0 = vector.load %arg1[%c0, %c0_0] : memref<128x128xf32, #tpu.memory_space<vmem>>, vector<128x128xf32>
    %c0_1 = arith.constant 0 : index
    %c0_2 = arith.constant 0 : index
    %1 = vector.load %arg2[%c0_1, %c0_2] : memref<1x128xf32, #tpu.memory_space<vmem>>, vector<1x128xf32>
    %c0_3 = arith.constant 0 : index
    %2 = memref.load %arg3[%c0_3] : memref<1xf32, #tpu.memory_space<smem>>
    %3 = arith.mulf %0, %0 : vector<128x128xf32>
    %cst = arith.constant dense<0.000000e+00> : vector<128xf32>
    %4 = vector.multi_reduction <add>, %3, %cst [1] : vector<128x128xf32> to vector<128xf32>
    %5 = vector.shape_cast %4 : vector<128xf32> to vector<128x1xf32>
    %6 = vector.broadcast %1 : vector<1x128xf32> to vector<128x128xf32>
    %7 = arith.mulf %0, %6 : vector<128x128xf32>
    %cst_4 = arith.constant dense<0.000000e+00> : vector<128xf32>
    %8 = vector.multi_reduction <add>, %7, %cst_4 [1] : vector<128x128xf32> to vector<128xf32>
    %9 = vector.shape_cast %8 : vector<128xf32> to vector<128x1xf32>
    %10 = math.sqrt %5 : vector<128x1xf32>
    %cst_5 = arith.constant 1.000000e-15 : f32
    %11 = vector.broadcast %cst_5 : f32 to vector<128x1xf32>
    %12 = arith.maximumf %10, %11 : vector<128x1xf32>
    %cst_6 = arith.constant 1.000000e+00 : f32
    %13 = vector.broadcast %cst_6 : f32 to vector<128x1xf32>
    %14 = arith.mulf %13, %12 : vector<128x1xf32>
    %cst_7 = arith.constant -0.99999988 : f32
    %cst_8 = arith.constant 0.99999988 : f32
    %15 = vector.broadcast %cst_7 : f32 to vector<128x1xf32>
    %16 = arith.maximumf %15, %14 : vector<128x1xf32>
    %17 = vector.broadcast %cst_8 : f32 to vector<128x1xf32>
    %18 = arith.minimumf %17, %16 : vector<128x1xf32>
    %cst_9 = arith.constant 1.000000e+00 : f32
    %19 = vector.broadcast %cst_9 : f32 to vector<128x1xf32>
    %20 = arith.addf %19, %18 : vector<128x1xf32>
    %cst_10 = arith.constant 1.000000e+00 : f32
    %21 = vector.broadcast %cst_10 : f32 to vector<128x1xf32>
    %22 = arith.subf %21, %18 : vector<128x1xf32>
    %23 = arith.divf %20, %22 : vector<128x1xf32>
    %24 = math.log %23 : vector<128x1xf32>
    %cst_11 = arith.constant 5.000000e-01 : f32
    %25 = vector.broadcast %cst_11 : f32 to vector<128x1xf32>
    %26 = arith.mulf %25, %24 : vector<128x1xf32>
    %cst_12 = arith.constant 1.000000e+00 : f32
    %27 = vector.broadcast %cst_12 : f32 to vector<128x1xf32>
    %28 = arith.mulf %27, %12 : vector<128x1xf32>
    %29 = arith.divf %26, %28 : vector<128x1xf32>
    %30 = arith.mulf %29, %9 : vector<128x1xf32>
    %31 = vector.broadcast %2 : f32 to vector<128x1xf32>
    %32 = arith.addf %30, %31 : vector<128x1xf32>
    %cst_13 = arith.constant 0.000000e+00 : f32
    %33 = vector.broadcast %cst_13 : f32 to vector<128x1xf32>
    %34 = arith.maximumf %32, %33 : vector<128x1xf32>
    %c0_14 = arith.constant 0 : index
    %c0_15 = arith.constant 0 : index
    %35 = vector.load %arg4[%c0_14, %c0_15] : memref<128x1xf32, #tpu.memory_space<vmem>>, vector<128x1xf32>
    tpu.vector_store %arg4[%c0_14, %c0_15], %34 {strides = array<i32>} : memref<128x1xf32, #tpu.memory_space<vmem>>, vector<128x1xf32>,
    return
  }
  func.func @transform_0(%arg0: i32) -> (i32, i32) {
    %c0_i32 = arith.constant 0 : i32
    %c0_i32_0 = arith.constant 0 : i32
    return %arg0, %c0_i32 : i32, i32
  }
  func.func @transform_1(%arg0: i32) -> (i32, i32) {
    %c0_i32 = arith.constant 0 : i32
    %c0_i32_0 = arith.constant 0 : i32
    %c0_i32_1 = arith.constant 0 : i32
    return %c0_i32, %c0_i32_0 : i32, i32
  }
  func.func @transform_2(%arg0: i32) -> i32 {
    %c0_i32 = arith.constant 0 : i32
    %c0_i32_0 = arith.constant 0 : i32
    return %c0_i32 : i32
  }
  func.func @transform_3(%arg0: i32) -> (i32, i32) {
    %c0_i32 = arith.constant 0 : i32
    %c0_i32_0 = arith.constant 0 : i32
    return %arg0, %c0_i32 : i32, i32
  }
}

</mosaic_0001>

<llo_original>
// kernel: tpu_custom_call.1
$region0: #{tpu_custom_call.1}
  #allocation0 [shape = 'u32[]', space=smem, size = 0x4, offset = 0x4, fixed_abs, tag = 'smem constant byte address 0x4 - core index']
  #allocation1 [shape = 'u32[72,128]{1,0:T(1,128)}', space=vmem, size = 0x9000, scoped, tag = 'internal scratch']
  #allocation2 [shape = 'f32[1]{0:T(128)S(6)}', space=smem, size = 0x200, scoped, tag = 'scoped memory for tpu_custom_call.1']
  %s0 = inlined_call_operand.hbm [shape: f32[256,128], index: 0, kind: input, shape index: {}]
  %s1 = inlined_call_operand.vmem [shape: f32[1,128], index: 1, kind: input, shape index: {}]
  %s2 = inlined_call_operand.<no memory space> [shape: f32[1], index: 2, kind: input, shape index: {}]
  %s3 = inlined_call_operand.vmem [shape: f32[256,1], index: 3, kind: output, shape index: {}]
  %s4 = sld [smem:[#allocation0]]
  $region49: #{tpu_custom_call.1} parent=0
    _
  %s6 = ssub.s32 1, %s4
  %s7 = scalar_select 0, %s6, %s4
  %8 = sst [smem:[#allocation2]] %s2
  $region1: #{tpu_custom_call.1} parent=0
    #allocation3 [shape = 'u8[131072]{0}', space=vmem, size = 0x20000, scoped, tag = 'input window, operand 0']
    #allocation4 [shape = 's32[2]{0}', space=sflag, size = 0x8, scoped, tag = 'scoped memory for tpu_custom_call.1']
    %9 = vsyncpa [#allocation4], 0
    %s10 = scalar_lea.sflag [#allocation4], 1
    %11 = vsyncpa %s10, 0
    loop: start=0, step=1, limit=4
    $region2: #{tpu_custom_call.1} parent=1 // loop_pre_header
      _
    $region3: #{tpu_custom_call.1} parent=1 // loop_header
      %s13 = sphi 0, %s17
      %p14 = scmp.ge.s32.totalorder %s13, 4
      %s23 = sphi 0, %s25
      %s26 = sphi 0, %s23
      %s27 = sphi 0, %s26
      %s43 = sphi 0, %s27
      %s47 = sphi 0, %s47
      %s49 = sphi 0, %s47
      %s50 = sphi 0, %s49
      %s64 = sphi 0, %s50
      %s68 = sphi 0, %s68
      %s70 = sphi 0, %s68
      %s71 = sphi 0, %s70
      %s85 = sphi 0, %s71
      %s91 = sphi 0, %s93
      %s94 = sphi 0, %s91
      %s95 = sphi 0, %s94
      %s111 = sphi 0, %s95
    $region4: #{tpu_custom_call.1} parent=1 // loop_header_branch
      %16 = sbr.rel (%p14) target = $region8
    $region5: #{tpu_custom_call.1} parent=1 // loop_body
      %s18 = ssub.s32 %s13, 1
      %s19 = ssub.s32 %s13, 2
      %s20 = sadd.s32 %s13, 1
      %s21 = ssub.s32 %s13, %s20
      %p22 = scmp.eq.s32.totalorder %s21, 0
      %s24 = sadd.s32 %s23, 1
      %s25 = scalar_select %p22, %s23, %s24
      %p28 = pneg %p22
      %p29 = scmp.eq.s32.totalorder %s13, 1
      %p30 = por %p28, %p29
      %p31 = scmp.ne.s32.totalorder %s23, %s26
      %p32 = scmp.eq.s32.totalorder %s13, 0
      %p33 = por %p31, %p32
      %p34 = scmp.ne.s32.totalorder %s23, %s26
      %p35 = scmp.eq.s32.totalorder %s18, 1
      %p36 = por %p34, %p35
      %p37 = scmp.ne.s32.totalorder %s26, %s27
      %p38 = scmp.eq.s32.totalorder %s18, 0
      %p39 = por %p37, %p38
      %p40 = scmp.ne.s32.totalorder %s26, %s27
      %p41 = scmp.eq.s32.totalorder %s19, 1
      %p42 = por %p40, %p41
      %p44 = scmp.ne.s32.totalorder %s27, %s43
      %p45 = scmp.eq.s32.totalorder %s19, 0
      %p46 = por %p44, %p45
      %s48 = sadd.s32 %s47, 1
      %p51 = scmp.eq.s32.totalorder %s13, 1
      %p52 = scmp.ne.s32.totalorder %s47, %s49
      %p53 = scmp.eq.s32.totalorder %s13, 0
      %p54 = por %p52, %p53
      %p55 = scmp.ne.s32.totalorder %s47, %s49
      %p56 = scmp.eq.s32.totalorder %s18, 1
      %p57 = por %p55, %p56
      %p58 = scmp.ne.s32.totalorder %s49, %s50
      %p59 = scmp.eq.s32.totalorder %s18, 0
      %p60 = por %p58, %p59
      %p61 = scmp.ne.s32.totalorder %s49, %s50
      %p62 = scmp.eq.s32.totalorder %s19, 1
      %p63 = por %p61, %p62
      %p65 = scmp.ne.s32.totalorder %s50, %s64
      %p66 = scmp.eq.s32.totalorder %s19, 0
      %p67 = por %p65, %p66
      %s69 = sadd.s32 %s68, 1
      %p72 = scmp.eq.s32.totalorder %s13, 1
      %p73 = scmp.ne.s32.totalorder %s68, %s70
      %p74 = scmp.eq.s32.totalorder %s13, 0
      %p75 = por %p73, %p74
      %p76 = scmp.ne.s32.totalorder %s68, %s70
      %p77 = scmp.eq.s32.totalorder %s18, 1
      %p78 = por %p76, %p77
      %p79 = scmp.ne.s32.totalorder %s70, %s71
      %p80 = scmp.eq.s32.totalorder %s18, 0
      %p81 = por %p79, %p80
      %p82 = scmp.ne.s32.totalorder %s70, %s71
      %p83 = scmp.eq.s32.totalorder %s19, 1
      %p84 = por %p82, %p83
      %p86 = scmp.ne.s32.totalorder %s71, %s85
      %p87 = scmp.eq.s32.totalorder %s19, 0
      %p88 = por %p86, %p87
      %s89 = ssub.s32 %s13, %s20
      %p90 = scmp.eq.s32.totalorder %s89, 0
      %s92 = sadd.s32 %s91, 1
      %s93 = scalar_select %p90, %s91, %s92
      %p96 = pneg %p90
      %p97 = scmp.eq.s32.totalorder %s13, 1
      %p98 = por %p96, %p97
      %p99 = scmp.ne.s32.totalorder %s91, %s94
      %p100 = scmp.eq.s32.totalorder %s13, 0
      %p101 = por %p99, %p100
      %p102 = scmp.ne.s32.totalorder %s91, %s94
      %p103 = scmp.eq.s32.totalorder %s18, 1
      %p104 = por %p102, %p103
      %p105 = scmp.ne.s32.totalorder %s94, %s95
      %p106 = scmp.eq.s32.totalorder %s18, 0
      %p107 = por %p105, %p106
      %p108 = scmp.ne.s32.totalorder %s94, %s95
      %p109 = scmp.eq.s32.totalorder %s19, 1
      %p110 = por %p108, %p109
      %p112 = scmp.ne.s32.totalorder %s95, %s111
      %p113 = scmp.eq.s32.totalorder %s19, 0
      %p114 = por %p112, %p113
      %p115 = scmp.le.s32.totalorder 1, %s13
      %p116 = scmp.lt.s32.totalorder %s13, 3
      %p117 = pnand %p115, %p116
      %p118 = pneg %p117
      // Predicated region
      $region9: #{tpu_custom_call.1} parent=5 // pred_check
        _
      $region10: #{tpu_custom_call.1} parent=5 // pred_check_branch
        %120 = sbr.rel (%p117) target = $region12
      $region11: #{tpu_custom_call.1} parent=5 // pred_region
        %s121 = ssub.s32 %s13, 1
        // Predicated region
        $region13: #{tpu_custom_call.1} parent=11 // pred_check
          %p122 = pneg %p60
        $region14: #{tpu_custom_call.1} parent=11 // pred_check_branch
          %124 = sbr.rel (%p122) target = $region16
        $region15: #{tpu_custom_call.1} parent=11 // pred_region
          _
        $region16: #{tpu_custom_call.1} parent=11 // pred_fallthru
          _
        // Predicated region
        $region17: #{tpu_custom_call.1} parent=11 // pred_check
          %p125 = pneg %p81
        $region18: #{tpu_custom_call.1} parent=11 // pred_check_branch
          %127 = sbr.rel (%p125) target = $region20
        $region19: #{tpu_custom_call.1} parent=11 // pred_region
          _
        $region20: #{tpu_custom_call.1} parent=11 // pred_fallthru
          _
      $region12: #{tpu_custom_call.1} parent=5 // pred_fallthru
        _
      %p128 = scmp.lt.s32.totalorder %s13, 2
      // Predicated region
      $region21: #{tpu_custom_call.1} parent=5 // pred_check
        %p129 = pneg %p128
      $region22: #{tpu_custom_call.1} parent=5 // pred_check_branch
        %131 = sbr.rel (%p129) target = $region24
      $region23: #{tpu_custom_call.1} parent=5 // pred_region
        // Predicated region
        $region25: #{tpu_custom_call.1} parent=23 // pred_check
          %p132 = pneg %p33
        $region26: #{tpu_custom_call.1} parent=23 // pred_check_branch
          %134 = sbr.rel (%p132) target = $region28
        $region27: #{tpu_custom_call.1} parent=23 // pred_region
          %s135 = sand.u32 %s23, 1
          %s136 = scalar_lea.sflag [#allocation4], %s135
          %s137 = sand.u32 %s23, 1
          %s138 = smul.addr %s137, 128
          %s139 = scalar_lea.vmem [#allocation3], %s138
          %s140 = smul.u32 16, %s13
          %142 = vsyncadd %s136, 0
          %s143 = smul.addr %s140, 8
          %s144 = scalar_lea.hbm %s0, %s143
          %s145 = sshll.u32 %s144, 4
          %s146 = int_to_ptr.hbm [resolvable:$true] %s145
          %s147 = sshll.u32 %s139, 4
          %s148 = int_to_ptr.vmem [resolvable:$true] %s147
          %153 = dma.hbm_to_vmem [thread:$0]  %s146, 2048, %s148, %s136, 128, 128, 8
        $region28: #{tpu_custom_call.1} parent=23 // pred_fallthru
          _
      $region24: #{tpu_custom_call.1} parent=5 // pred_fallthru
        _
      %p154 = scmp.le.s32.totalorder 1, %s13
      %p155 = scmp.lt.s32.totalorder %s13, 3
      %p156 = pnand %p154, %p155
      %p157 = pneg %p156
      // Predicated region
      $region29: #{tpu_custom_call.1} parent=5 // pred_check
        _
      $region30: #{tpu_custom_call.1} parent=5 // pred_check_branch
        %159 = sbr.rel (%p156) target = $region32
      $region31: #{tpu_custom_call.1} parent=5 // pred_region
        %s160 = ssub.s32 %s13, 1
        %s161 = sand.u32 %s26, 1
        %s162 = scalar_lea.sflag [#allocation4], %s161
        %s163 = sand.u32 %s26, 1
        %s164 = smul.addr %s163, 128
        %s165 = scalar_lea.vmem [#allocation3], %s164
        // Predicated region
        $region33: #{tpu_custom_call.1} parent=31 // pred_check
          %p166 = pneg %p39
        $region34: #{tpu_custom_call.1} parent=31 // pred_check_branch
          %168 = sbr.rel (%p166) target = $region36
        $region35: #{tpu_custom_call.1} parent=31 // pred_region
          %170 = dma.done %s162, 2048
        $region36: #{tpu_custom_call.1} parent=31 // pred_fallthru
          _
        %s171 = sand.u32 %s26, 1
        %s172 = scalar_lea.sflag [#allocation4], %s171
        %s173 = sand.u32 %s26, 1
        %s174 = smul.addr %s173, 128
        %s175 = scalar_lea.vmem [#allocation3], %s174
        %p176 = pneg %p39
        %p177 = pneg %p36
        %p178 = pneg %p60
        %p179 = pneg %p57
        %p180 = pneg %p81
        %p181 = pneg %p78
        %p182 = pneg %p107
        %p183 = pneg %p104
        %s184 = smul.u32 16, %s18
        %p185 = scmp.lt.s32.totalorder %s184, 31
        %s186 = scalar_select %p185, %s184, 31
        %s187 = smul.addr %s186, 8
        %s188 = scalar_lea.vmem %s3, %s187
        %s189 = smul.u32 16, %s18
        %s190 = smul.u32 16, %s18
        %p191 = scmp.lt.s32.totalorder %s190, 31
        %s192 = scalar_select %p191, %s190, 31
        %s193 = smul.addr %s192, 8
        %s194 = scalar_lea.vmem %s3, %s193
        %s195 = smul.u32 16, %s18
        %v196 = vld [vmem:[%s165] sm:$0xff]
        %v197 = vld [vmem:[%s165 + $0x8] sm:$0xff]
        %v198 = vld [vmem:[%s165 + $0x10] sm:$0xff]
        %v199 = vld [vmem:[%s165 + $0x18] sm:$0xff]
        %v200 = vld [vmem:[%s165 + $0x20] sm:$0xff]
        %v201 = vld [vmem:[%s165 + $0x28] sm:$0xff]
        %v202 = vld [vmem:[%s165 + $0x30] sm:$0xff]
        %v203 = vld [vmem:[%s165 + $0x38] sm:$0xff]
        %v204 = vld [vmem:[%s165 + $0x40] sm:$0xff]
        %v205 = vld [vmem:[%s165 + $0x48] sm:$0xff]
        %v206 = vld [vmem:[%s165 + $0x50] sm:$0xff]
        %v207 = vld [vmem:[%s165 + $0x58] sm:$0xff]
        %v208 = vld [vmem:[%s165 + $0x60] sm:$0xff]
        %v209 = vld [vmem:[%s165 + $0x68] sm:$0xff]
        %v210 = vld [vmem:[%s165 + $0x70] sm:$0xff]
        %v211 = vld [vmem:[%s165 + $0x78] sm:$0xff]
        %v212 = vld [vmem:[%s1] sm:$0x1]
        %s213 = sld [smem:[#allocation2]]
        %v214 = vmul.f32 %v196, %v196
        %v215 = vmul.f32 %v197, %v197
        %v216 = vmul.f32 %v198, %v198
        %v217 = vmul.f32 %v199, %v199
        %v218 = vmul.f32 %v200, %v200
        %v219 = vmul.f32 %v201, %v201
        %v220 = vmul.f32 %v202, %v202
        %v221 = vmul.f32 %v203, %v203
        %v222 = vmul.f32 %v204, %v204
        %v223 = vmul.f32 %v205, %v205
        %v224 = vmul.f32 %v206, %v206
        %v225 = vmul.f32 %v207, %v207
        %v226 = vmul.f32 %v208, %v208
        %v227 = vmul.f32 %v209, %v209
        %v228 = vmul.f32 %v210, %v210
        %v229 = vmul.f32 %v211, %v211
        %230 = vadd.xlane.f32.xlu0 %v214
        %v231 = vpop.xlane.xlu0 %230
        %232 = vadd.xlane.f32.xlu0 %v215
        %v233 = vpop.xlane.xlu0 %232
        %234 = vadd.xlane.f32.xlu0 %v216
        %v235 = vpop.xlane.xlu0 %234
        %236 = vadd.xlane.f32.xlu0 %v217
        %v237 = vpop.xlane.xlu0 %236
        %238 = vadd.xlane.f32.xlu0 %v218
        %v239 = vpop.xlane.xlu0 %238
        %240 = vadd.xlane.f32.xlu0 %v219
        %v241 = vpop.xlane.xlu0 %240
        %242 = vadd.xlane.f32.xlu0 %v220
        %v243 = vpop.xlane.xlu0 %242
        %244 = vadd.xlane.f32.xlu0 %v221
        %v245 = vpop.xlane.xlu0 %244
        %246 = vadd.xlane.f32.xlu0 %v222
        %v247 = vpop.xlane.xlu0 %246
        %248 = vadd.xlane.f32.xlu0 %v223
        %v249 = vpop.xlane.xlu0 %248
        %250 = vadd.xlane.f32.xlu0 %v224
        %v251 = vpop.xlane.xlu0 %250
        %252 = vadd.xlane.f32.xlu0 %v225
        %v253 = vpop.xlane.xlu0 %252
        %254 = vadd.xlane.f32.xlu0 %v226
        %v255 = vpop.xlane.xlu0 %254
        %256 = vadd.xlane.f32.xlu0 %v227
        %v257 = vpop.xlane.xlu0 %256
        %258 = vadd.xlane.f32.xlu0 %v228
        %v259 = vpop.xlane.xlu0 %258
        %260 = vadd.xlane.f32.xlu0 %v229
        %v261 = vpop.xlane.xlu0 %260
        %v263 = vperm.slane %v212, 0
        %v265 = vmul.f32 %v196, %v263
        %v266 = vmul.f32 %v197, %v263
        %v267 = vmul.f32 %v198, %v263
        %v268 = vmul.f32 %v199, %v263
        %v269 = vmul.f32 %v200, %v263
        %v270 = vmul.f32 %v201, %v263
        %v271 = vmul.f32 %v202, %v263
        %v272 = vmul.f32 %v203, %v263
        %v273 = vmul.f32 %v204, %v263
        %v274 = vmul.f32 %v205, %v263
        %v275 = vmul.f32 %v206, %v263
        %v276 = vmul.f32 %v207, %v263
        %v277 = vmul.f32 %v208, %v263
        %v278 = vmul.f32 %v209, %v263
        %v279 = vmul.f32 %v210, %v263
        %v280 = vmul.f32 %v211, %v263
        %281 = vadd.xlane.f32.xlu0 %v265
        %v282 = vpop.xlane.xlu0 %281
        %283 = vadd.xlane.f32.xlu0 %v266
        %v284 = vpop.xlane.xlu0 %283
        %285 = vadd.xlane.f32.xlu0 %v267
        %v286 = vpop.xlane.xlu0 %285
        %287 = vadd.xlane.f32.xlu0 %v268
        %v288 = vpop.xlane.xlu0 %287
        %289 = vadd.xlane.f32.xlu0 %v269
        %v290 = vpop.xlane.xlu0 %289
        %291 = vadd.xlane.f32.xlu0 %v270
        %v292 = vpop.xlane.xlu0 %291
        %293 = vadd.xlane.f32.xlu0 %v271
        %v294 = vpop.xlane.xlu0 %293
        %295 = vadd.xlane.f32.xlu0 %v272
        %v296 = vpop.xlane.xlu0 %295
        %297 = vadd.xlane.f32.xlu0 %v273
        %v298 = vpop.xlane.xlu0 %297
        %299 = vadd.xlane.f32.xlu0 %v274
        %v300 = vpop.xlane.xlu0 %299
        %301 = vadd.xlane.f32.xlu0 %v275
        %v302 = vpop.xlane.xlu0 %301
        %303 = vadd.xlane.f32.xlu0 %v276
        %v304 = vpop.xlane.xlu0 %303
        %305 = vadd.xlane.f32.xlu0 %v277
        %v306 = vpop.xlane.xlu0 %305
        %307 = vadd.xlane.f32.xlu0 %v278
        %v308 = vpop.xlane.xlu0 %307
        %309 = vadd.xlane.f32.xlu0 %v279
        %v310 = vpop.xlane.xlu0 %309
        %311 = vadd.xlane.f32.xlu0 %v280
        %v312 = vpop.xlane.xlu0 %311
        %v313 = vrsqrt.pop %v231
        %v314 = vmul.f32 %v313, %v231
        %v315 = vmul.f32 %v314, %v313
        %v316 = vmul.f32 0.5, %v315
        %v317 = vsub.f32 1.5, %v316
        %v318 = vmul.f32 %v313, %v317
        %v319 = vmul.f32 %v231, %v318
        %vm320 = vcmp.eq.f32.partialorder %v231, inf
        %v321 = vsel %vm320, %v231, %v319
        %vm322 = vcmp.eq.f32.partialorder %v231, 0.0
        %v323 = vand.u32 %v231, 2147483648
        %v324 = vsel %vm322, %v323, %v321
        %v325 = vrsqrt.pop %v233
        %v326 = vmul.f32 %v325, %v233
        %v327 = vmul.f32 %v326, %v325
        %v328 = vmul.f32 0.5, %v327
        %v329 = vsub.f32 1.5, %v328
        %v330 = vmul.f32 %v325, %v329
        %v331 = vmul.f32 %v233, %v330
        %vm332 = vcmp.eq.f32.partialorder %v233, inf
        %v333 = vsel %vm332, %v233, %v331
        %vm334 = vcmp.eq.f32.partialorder %v233, 0.0
        %v335 = vand.u32 %v233, 2147483648
        %v336 = vsel %vm334, %v335, %v333
        %v337 = vrsqrt.pop %v235
        %v338 = vmul.f32 %v337, %v235
        %v339 = vmul.f32 %v338, %v337
        %v340 = vmul.f32 0.5, %v339
        %v341 = vsub.f32 1.5, %v340
        %v342 = vmul.f32 %v337, %v341
        %v343 = vmul.f32 %v235, %v342
        %vm344 = vcmp.eq.f32.partialorder %v235, inf
        %v345 = vsel %vm344, %v235, %v343
        %vm346 = vcmp.eq.f32.partialorder %v235, 0.0
        %v347 = vand.u32 %v235, 2147483648
        %v348 = vsel %vm346, %v347, %v345
        %v349 = vrsqrt.pop %v237
        %v350 = vmul.f32 %v349, %v237
        %v351 = vmul.f32 %v350, %v349
        %v352 = vmul.f32 0.5, %v351
        %v353 = vsub.f32 1.5, %v352
        %v354 = vmul.f32 %v349, %v353
        %v355 = vmul.f32 %v237, %v354
        %vm356 = vcmp.eq.f32.partialorder %v237, inf
        %v357 = vsel %vm356, %v237, %v355
        %vm358 = vcmp.eq.f32.partialorder %v237, 0.0
        %v359 = vand.u32 %v237, 2147483648
        %v360 = vsel %vm358, %v359, %v357
        %v361 = vrsqrt.pop %v239
        %v362 = vmul.f32 %v361, %v239
        %v363 = vmul.f32 %v362, %v361
        %v364 = vmul.f32 0.5, %v363
        %v365 = vsub.f32 1.5, %v364
        %v366 = vmul.f32 %v361, %v365
        %v367 = vmul.f32 %v239, %v366
        %vm368 = vcmp.eq.f32.partialorder %v239, inf
        %v369 = vsel %vm368, %v239, %v367
        %vm370 = vcmp.eq.f32.partialorder %v239, 0.0
        %v371 = vand.u32 %v239, 2147483648
        %v372 = vsel %vm370, %v371, %v369
        %v373 = vrsqrt.pop %v241
        %v374 = vmul.f32 %v373, %v241
        %v375 = vmul.f32 %v374, %v373
        %v376 = vmul.f32 0.5, %v375
        %v377 = vsub.f32 1.5, %v376
        %v378 = vmul.f32 %v373, %v377
        %v379 = vmul.f32 %v241, %v378
        %vm380 = vcmp.eq.f32.partialorder %v241, inf
        %v381 = vsel %vm380, %v241, %v379
        %vm382 = vcmp.eq.f32.partialorder %v241, 0.0
        %v383 = vand.u32 %v241, 2147483648
        %v384 = vsel %vm382, %v383, %v381
        %v385 = vrsqrt.pop %v243
        %v386 = vmul.f32 %v385, %v243
        %v387 = vmul.f32 %v386, %v385
        %v388 = vmul.f32 0.5, %v387
        %v389 = vsub.f32 1.5, %v388
        %v390 = vmul.f32 %v385, %v389
        %v391 = vmul.f32 %v243, %v390
        %vm392 = vcmp.eq.f32.partialorder %v243, inf
        %v393 = vsel %vm392, %v243, %v391
        %vm394 = vcmp.eq.f32.partialorder %v243, 0.0
        %v395 = vand.u32 %v243, 2147483648
        %v396 = vsel %vm394, %v395, %v393
        %v397 = vrsqrt.pop %v245
        %v398 = vmul.f32 %v397, %v245
        %v399 = vmul.f32 %v398, %v397
        %v400 = vmul.f32 0.5, %v399
        %v401 = vsub.f32 1.5, %v400
        %v402 = vmul.f32 %v397, %v401
        %v403 = vmul.f32 %v245, %v402
        %vm404 = vcmp.eq.f32.partialorder %v245, inf
        %v405 = vsel %vm404, %v245, %v403
        %vm406 = vcmp.eq.f32.partialorder %v245, 0.0
        %v407 = vand.u32 %v245, 2147483648
        %v408 = vsel %vm406, %v407, %v405
        %v409 = vrsqrt.pop %v247
        %v410 = vmul.f32 %v409, %v247
        %v411 = vmul.f32 %v410, %v409
        %v412 = vmul.f32 0.5, %v411
        %v413 = vsub.f32 1.5, %v412
        %v414 = vmul.f32 %v409, %v413
        %v415 = vmul.f32 %v247, %v414
        %vm416 = vcmp.eq.f32.partialorder %v247, inf
        %v417 = vsel %vm416, %v247, %v415
        %vm418 = vcmp.eq.f32.partialorder %v247, 0.0
        %v419 = vand.u32 %v247, 2147483648
        %v420 = vsel %vm418, %v419, %v417
        %v421 = vrsqrt.pop %v249
        %v422 = vmul.f32 %v421, %v249
        %v423 = vmul.f32 %v422, %v421
        %v424 = vmul.f32 0.5, %v423
        %v425 = vsub.f32 1.5, %v424
        %v426 = vmul.f32 %v421, %v425
        %v427 = vmul.f32 %v249, %v426
        %vm428 = vcmp.eq.f32.partialorder %v249, inf
        %v429 = vsel %vm428, %v249, %v427
        %vm430 = vcmp.eq.f32.partialorder %v249, 0.0
        %v431 = vand.u32 %v249, 2147483648
        %v432 = vsel %vm430, %v431, %v429
        %v433 = vrsqrt.pop %v251
        %v434 = vmul.f32 %v433, %v251
        %v435 = vmul.f32 %v434, %v433
        %v436 = vmul.f32 0.5, %v435
        %v437 = vsub.f32 1.5, %v436
        %v438 = vmul.f32 %v433, %v437
        %v439 = vmul.f32 %v251, %v438
        %vm440 = vcmp.eq.f32.partialorder %v251, inf
        %v441 = vsel %vm440, %v251, %v439
        %vm442 = vcmp.eq.f32.partialorder %v251, 0.0
        %v443 = vand.u32 %v251, 2147483648
        %v444 = vsel %vm442, %v443, %v441
        %v445 = vrsqrt.pop %v253
        %v446 = vmul.f32 %v445, %v253
        %v447 = vmul.f32 %v446, %v445
        %v448 = vmul.f32 0.5, %v447
        %v449 = vsub.f32 1.5, %v448
        %v450 = vmul.f32 %v445, %v449
        %v451 = vmul.f32 %v253, %v450
        %vm452 = vcmp.eq.f32.partialorder %v253, inf
        %v453 = vsel %vm452, %v253, %v451
        %vm454 = vcmp.eq.f32.partialorder %v253, 0.0
        %v455 = vand.u32 %v253, 2147483648
        %v456 = vsel %vm454, %v455, %v453
        %v457 = vrsqrt.pop %v255
        %v458 = vmul.f32 %v457, %v255
        %v459 = vmul.f32 %v458, %v457
        %v460 = vmul.f32 0.5, %v459
        %v461 = vsub.f32 1.5, %v460
        %v462 = vmul.f32 %v457, %v461
        %v463 = vmul.f32 %v255, %v462
        %vm464 = vcmp.eq.f32.partialorder %v255, inf
        %v465 = vsel %vm464, %v255, %v463
        %vm466 = vcmp.eq.f32.partialorder %v255, 0.0
        %v467 = vand.u32 %v255, 2147483648
        %v468 = vsel %vm466, %v467, %v465
        %v469 = vrsqrt.pop %v257
        %v470 = vmul.f32 %v469, %v257
        %v471 = vmul.f32 %v470, %v469
        %v472 = vmul.f32 0.5, %v471
        %v473 = vsub.f32 1.5, %v472
        %v474 = vmul.f32 %v469, %v473
        %v475 = vmul.f32 %v257, %v474
        %vm476 = vcmp.eq.f32.partialorder %v257, inf
        %v477 = vsel %vm476, %v257, %v475
        %vm478 = vcmp.eq.f32.partialorder %v257, 0.0
        %v479 = vand.u32 %v257, 2147483648
        %v480 = vsel %vm478, %v479, %v477
        %v481 = vrsqrt.pop %v259
        %v482 = vmul.f32 %v481, %v259
        %v483 = vmul.f32 %v482, %v481
        %v484 = vmul.f32 0.5, %v483
        %v485 = vsub.f32 1.5, %v484
        %v486 = vmul.f32 %v481, %v485
        %v487 = vmul.f32 %v259, %v486
        %vm488 = vcmp.eq.f32.partialorder %v259, inf
        %v489 = vsel %vm488, %v259, %v487
        %vm490 = vcmp.eq.f32.partialorder %v259, 0.0
        %v491 = vand.u32 %v259, 2147483648
        %v492 = vsel %vm490, %v491, %v489
        %v493 = vrsqrt.pop %v261
        %v494 = vmul.f32 %v493, %v261
        %v495 = vmul.f32 %v494, %v493
        %v496 = vmul.f32 0.5, %v495
        %v497 = vsub.f32 1.5, %v496
        %v498 = vmul.f32 %v493, %v497
        %v499 = vmul.f32 %v261, %v498
        %vm500 = vcmp.eq.f32.partialorder %v261, inf
        %v501 = vsel %vm500, %v261, %v499
        %vm502 = vcmp.eq.f32.partialorder %v261, 0.0
        %v503 = vand.u32 %v261, 2147483648
        %v504 = vsel %vm502, %v503, %v501
        %v505 = vmax.f32 %v324, 1e-15
        %v506 = vmax.f32 %v336, 1e-15
        %v507 = vmax.f32 %v348, 1e-15
        %v508 = vmax.f32 %v360, 1e-15
        %v509 = vmax.f32 %v372, 1e-15
        %v510 = vmax.f32 %v384, 1e-15
        %v511 = vmax.f32 %v396, 1e-15
        %v512 = vmax.f32 %v408, 1e-15
        %v513 = vmax.f32 %v420, 1e-15
        %v514 = vmax.f32 %v432, 1e-15
        %v515 = vmax.f32 %v444, 1e-15
        %v516 = vmax.f32 %v456, 1e-15
        %v517 = vmax.f32 %v468, 1e-15
        %v518 = vmax.f32 %v480, 1e-15
        %v519 = vmax.f32 %v492, 1e-15
        %v520 = vmax.f32 %v504, 1e-15
        %v521 = vmax.f32 %v505, -0.9999999
        %v522 = vmax.f32 %v506, -0.9999999
        %v523 = vmax.f32 %v507, -0.9999999
        %v524 = vmax.f32 %v508, -0.9999999
        %v525 = vmax.f32 %v509, -0.9999999
        %v526 = vmax.f32 %v510, -0.9999999
        %v527 = vmax.f32 %v511, -0.9999999
        %v528 = vmax.f32 %v512, -0.9999999
        %v529 = vmax.f32 %v513, -0.9999999
        %v530 = vmax.f32 %v514, -0.9999999
        %v531 = vmax.f32 %v515, -0.9999999
        %v532 = vmax.f32 %v516, -0.9999999
        %v533 = vmax.f32 %v517, -0.9999999
        %v534 = vmax.f32 %v518, -0.9999999
        %v535 = vmax.f32 %v519, -0.9999999
        %v536 = vmax.f32 %v520, -0.9999999
        %v537 = vmin.f32 %v521, 0.9999999
        %v538 = vmin.f32 %v522, 0.9999999
        %v539 = vmin.f32 %v523, 0.9999999
        %v540 = vmin.f32 %v524, 0.9999999
        %v541 = vmin.f32 %v525, 0.9999999
        %v542 = vmin.f32 %v526, 0.9999999
        %v543 = vmin.f32 %v527, 0.9999999
        %v544 = vmin.f32 %v528, 0.9999999
        %v545 = vmin.f32 %v529, 0.9999999
        %v546 = vmin.f32 %v530, 0.9999999
        %v547 = vmin.f32 %v531, 0.9999999
        %v548 = vmin.f32 %v532, 0.9999999
        %v549 = vmin.f32 %v533, 0.9999999
        %v550 = vmin.f32 %v534, 0.9999999
        %v551 = vmin.f32 %v535, 0.9999999
        %v552 = vmin.f32 %v536, 0.9999999
        %v553 = vadd.f32 %v537, 1.0
        %v554 = vadd.f32 %v538, 1.0
        %v555 = vadd.f32 %v539, 1.0
        %v556 = vadd.f32 %v540, 1.0
        %v557 = vadd.f32 %v541, 1.0
        %v558 = vadd.f32 %v542, 1.0
        %v559 = vadd.f32 %v543, 1.0
        %v560 = vadd.f32 %v544, 1.0
        %v561 = vadd.f32 %v545, 1.0
        %v562 = vadd.f32 %v546, 1.0
        %v563 = vadd.f32 %v547, 1.0
        %v564 = vadd.f32 %v548, 1.0
        %v565 = vadd.f32 %v549, 1.0
        %v566 = vadd.f32 %v550, 1.0
        %v567 = vadd.f32 %v551, 1.0
        %v568 = vadd.f32 %v552, 1.0
        %v569 = vsub.f32 1.0, %v537
        %v570 = vsub.f32 1.0, %v538
        %v571 = vsub.f32 1.0, %v539
        %v572 = vsub.f32 1.0, %v540
        %v573 = vsub.f32 1.0, %v541
        %v574 = vsub.f32 1.0, %v542
        %v575 = vsub.f32 1.0, %v543
        %v576 = vsub.f32 1.0, %v544
        %v577 = vsub.f32 1.0, %v545
        %v578 = vsub.f32 1.0, %v546
        %v579 = vsub.f32 1.0, %v547
        %v580 = vsub.f32 1.0, %v548
        %v581 = vsub.f32 1.0, %v549
        %v582 = vsub.f32 1.0, %v550
        %v583 = vsub.f32 1.0, %v551
        %v584 = vsub.f32 1.0, %v552
        %v585 = vrcp.pop %v569
        %v586 = vmul.f32 %v569, %v585
        %v587 = vsub.f32 1.0, %v586
        %v588 = vmul.f32 %v585, %v587
        %v589 = vadd.f32 %v585, %v588
        %vm590 = vweird.f32 %v569
        %vm591 = vweird.f32 %v585
        %vm592 = vmor %vm590, %vm591
        %v593 = vsel %vm592, %v585, %v589
        %v594 = vand.u32 2147483647, %v569
        %vm595 = vcmp.eq.f32.partialorder %v594, 8.507059e+37
        %v596 = vand.u32 %v569, 2147483648
        %v597 = vor.u32 1.1754944e-38, %v596
        %v598 = vsel %vm595, %v597, %v593
        %v599 = vmul.f32 %v553, %v598
        %v600 = vrcp.pop %v570
        %v601 = vmul.f32 %v570, %v600
        %v602 = vsub.f32 1.0, %v601
        %v603 = vmul.f32 %v600, %v602
        %v604 = vadd.f32 %v600, %v603
        %vm605 = vweird.f32 %v570
        %vm606 = vweird.f32 %v600
        %vm607 = vmor %vm605, %vm606
        %v608 = vsel %vm607, %v600, %v604
        %v609 = vand.u32 2147483647, %v570
        %vm610 = vcmp.eq.f32.partialorder %v609, 8.507059e+37
        %v611 = vand.u32 %v570, 2147483648
        %v612 = vor.u32 1.1754944e-38, %v611
        %v613 = vsel %vm610, %v612, %v608
        %v614 = vmul.f32 %v554, %v613
        %v615 = vrcp.pop %v571
        %v616 = vmul.f32 %v571, %v615
        %v617 = vsub.f32 1.0, %v616
        %v618 = vmul.f32 %v615, %v617
        %v619 = vadd.f32 %v615, %v618
        %vm620 = vweird.f32 %v571
        %vm621 = vweird.f32 %v615
        %vm622 = vmor %vm620, %vm621
        %v623 = vsel %vm622, %v615, %v619
        %v624 = vand.u32 2147483647, %v571
        %vm625 = vcmp.eq.f32.partialorder %v624, 8.507059e+37
        %v626 = vand.u32 %v571, 2147483648
        %v627 = vor.u32 1.1754944e-38, %v626
        %v628 = vsel %vm625, %v627, %v623
        %v629 = vmul.f32 %v555, %v628
        %v630 = vrcp.pop %v572
        %v631 = vmul.f32 %v572, %v630
        %v632 = vsub.f32 1.0, %v631
        %v633 = vmul.f32 %v630, %v632
        %v634 = vadd.f32 %v630, %v633
        %vm635 = vweird.f32 %v572
        %vm636 = vweird.f32 %v630
        %vm637 = vmor %vm635, %vm636
        %v638 = vsel %vm637, %v630, %v634
        %v639 = vand.u32 2147483647, %v572
        %vm640 = vcmp.eq.f32.partialorder %v639, 8.507059e+37
        %v641 = vand.u32 %v572, 2147483648
        %v642 = vor.u32 1.1754944e-38, %v641
        %v643 = vsel %vm640, %v642, %v638
        %v644 = vmul.f32 %v556, %v643
        %v645 = vrcp.pop %v573
        %v646 = vmul.f32 %v573, %v645
        %v647 = vsub.f32 1.0, %v646
        %v648 = vmul.f32 %v645, %v647
        %v649 = vadd.f32 %v645, %v648
        %vm650 = vweird.f32 %v573
        %vm651 = vweird.f32 %v645
        %vm652 = vmor %vm650, %vm651
        %v653 = vsel %vm652, %v645, %v649
        %v654 = vand.u32 2147483647, %v573
        %vm655 = vcmp.eq.f32.partialorder %v654, 8.507059e+37
        %v656 = vand.u32 %v573, 2147483648
        %v657 = vor.u32 1.1754944e-38, %v656
        %v658 = vsel %vm655, %v657, %v653
        %v659 = vmul.f32 %v557, %v658
        %v660 = vrcp.pop %v574
        %v661 = vmul.f32 %v574, %v660
        %v662 = vsub.f32 1.0, %v661
        %v663 = vmul.f32 %v660, %v662
        %v664 = vadd.f32 %v660, %v663
        %vm665 = vweird.f32 %v574
        %vm666 = vweird.f32 %v660
        %vm667 = vmor %vm665, %vm666
        %v668 = vsel %vm667, %v660, %v664
        %v669 = vand.u32 2147483647, %v574
        %vm670 = vcmp.eq.f32.partialorder %v669, 8.507059e+37
        %v671 = vand.u32 %v574, 2147483648
        %v672 = vor.u32 1.1754944e-38, %v671
        %v673 = vsel %vm670, %v672, %v668
        %v674 = vmul.f32 %v558, %v673
        %v675 = vrcp.pop %v575
        %v676 = vmul.f32 %v575, %v675
        %v677 = vsub.f32 1.0, %v676
        %v678 = vmul.f32 %v675, %v677
        %v679 = vadd.f32 %v675, %v678
        %vm680 = vweird.f32 %v575
        %vm681 = vweird.f32 %v675
        %vm682 = vmor %vm680, %vm681
        %v683 = vsel %vm682, %v675, %v679
        %v684 = vand.u32 2147483647, %v575
        %vm685 = vcmp.eq.f32.partialorder %v684, 8.507059e+37
        %v686 = vand.u32 %v575, 2147483648
        %v687 = vor.u32 1.1754944e-38, %v686
        %v688 = vsel %vm685, %v687, %v683
        %v689 = vmul.f32 %v559, %v688
        %v690 = vrcp.pop %v576
        %v691 = vmul.f32 %v576, %v690
        %v692 = vsub.f32 1.0, %v691
        %v693 = vmul.f32 %v690, %v692
        %v694 = vadd.f32 %v690, %v693
        %vm695 = vweird.f32 %v576
        %vm696 = vweird.f32 %v690
        %vm697 = vmor %vm695, %vm696
        %v698 = vsel %vm697, %v690, %v694
        %v699 = vand.u32 2147483647, %v576
        %vm700 = vcmp.eq.f32.partialorder %v699, 8.507059e+37
        %v701 = vand.u32 %v576, 2147483648
        %v702 = vor.u32 1.1754944e-38, %v701
        %v703 = vsel %vm700, %v702, %v698
        %v704 = vmul.f32 %v560, %v703
        %v705 = vrcp.pop %v577
        %v706 = vmul.f32 %v577, %v705
        %v707 = vsub.f32 1.0, %v706
        %v708 = vmul.f32 %v705, %v707
        %v709 = vadd.f32 %v705, %v708
        %vm710 = vweird.f32 %v577
        %vm711 = vweird.f32 %v705
        %vm712 = vmor %vm710, %vm711
        %v713 = vsel %vm712, %v705, %v709
        %v714 = vand.u32 2147483647, %v577
        %vm715 = vcmp.eq.f32.partialorder %v714, 8.507059e+37
        %v716 = vand.u32 %v577, 2147483648
        %v717 = vor.u32 1.1754944e-38, %v716
        %v718 = vsel %vm715, %v717, %v713
        %v719 = vmul.f32 %v561, %v718
        %v720 = vrcp.pop %v578
        %v721 = vmul.f32 %v578, %v720
        %v722 = vsub.f32 1.0, %v721
        %v723 = vmul.f32 %v720, %v722
        %v724 = vadd.f32 %v720, %v723
        %vm725 = vweird.f32 %v578
        %vm726 = vweird.f32 %v720
        %vm727 = vmor %vm725, %vm726
        %v728 = vsel %vm727, %v720, %v724
        %v729 = vand.u32 2147483647, %v578
        %vm730 = vcmp.eq.f32.partialorder %v729, 8.507059e+37
        %v731 = vand.u32 %v578, 2147483648
        %v732 = vor.u32 1.1754944e-38, %v731
        %v733 = vsel %vm730, %v732, %v728
        %v734 = vmul.f32 %v562, %v733
        %v735 = vrcp.pop %v579
        %v736 = vmul.f32 %v579, %v735
        %v737 = vsub.f32 1.0, %v736
        %v738 = vmul.f32 %v735, %v737
        %v739 = vadd.f32 %v735, %v738
        %vm740 = vweird.f32 %v579
        %vm741 = vweird.f32 %v735
        %vm742 = vmor %vm740, %vm741
        %v743 = vsel %vm742, %v735, %v739
        %v744 = vand.u32 2147483647, %v579
        %vm745 = vcmp.eq.f32.partialorder %v744, 8.507059e+37
        %v746 = vand.u32 %v579, 2147483648
        %v747 = vor.u32 1.1754944e-38, %v746
        %v748 = vsel %vm745, %v747, %v743
        %v749 = vmul.f32 %v563, %v748
        %v750 = vrcp.pop %v580
        %v751 = vmul.f32 %v580, %v750
        %v752 = vsub.f32 1.0, %v751
        %v753 = vmul.f32 %v750, %v752
        %v754 = vadd.f32 %v750, %v753
        %vm755 = vweird.f32 %v580
        %vm756 = vweird.f32 %v750
        %vm757 = vmor %vm755, %vm756
        %v758 = vsel %vm757, %v750, %v754
        %v759 = vand.u32 2147483647, %v580
        %vm760 = vcmp.eq.f32.partialorder %v759, 8.507059e+37
        %v761 = vand.u32 %v580, 2147483648
        %v762 = vor.u32 1.1754944e-38, %v761
        %v763 = vsel %vm760, %v762, %v758
        %v764 = vmul.f32 %v564, %v763
        %v765 = vrcp.pop %v581
        %v766 = vmul.f32 %v581, %v765
        %v767 = vsub.f32 1.0, %v766
        %v768 = vmul.f32 %v765, %v767
        %v769 = vadd.f32 %v765, %v768
        %vm770 = vweird.f32 %v581
        %vm771 = vweird.f32 %v765
        %vm772 = vmor %vm770, %vm771
        %v773 = vsel %vm772, %v765, %v769
        %v774 = vand.u32 2147483647, %v581
        %vm775 = vcmp.eq.f32.partialorder %v774, 8.507059e+37
        %v776 = vand.u32 %v581, 2147483648
        %v777 = vor.u32 1.1754944e-38, %v776
        %v778 = vsel %vm775, %v777, %v773
        %v779 = vmul.f32 %v565, %v778
        %v780 = vrcp.pop %v582
        %v781 = vmul.f32 %v582, %v780
        %v782 = vsub.f32 1.0, %v781
        %v783 = vmul.f32 %v780, %v782
        %v784 = vadd.f32 %v780, %v783
        %vm785 = vweird.f32 %v582
        %vm786 = vweird.f32 %v780
        %vm787 = vmor %vm785, %vm786
        %v788 = vsel %vm787, %v780, %v784
        %v789 = vand.u32 2147483647, %v582
        %vm790 = vcmp.eq.f32.partialorder %v789, 8.507059e+37
        %v791 = vand.u32 %v582, 2147483648
        %v792 = vor.u32 1.1754944e-38, %v791
        %v793 = vsel %vm790, %v792, %v788
        %v794 = vmul.f32 %v566, %v793
        %v795 = vrcp.pop %v583
        %v796 = vmul.f32 %v583, %v795
        %v797 = vsub.f32 1.0, %v796
        %v798 = vmul.f32 %v795, %v797
        %v799 = vadd.f32 %v795, %v798
        %vm800 = vweird.f32 %v583
        %vm801 = vweird.f32 %v795
        %vm802 = vmor %vm800, %vm801
        %v803 = vsel %vm802, %v795, %v799
        %v804 = vand.u32 2147483647, %v583
        %vm805 = vcmp.eq.f32.partialorder %v804, 8.507059e+37
        %v806 = vand.u32 %v583, 2147483648
        %v807 = vor.u32 1.1754944e-38, %v806
        %v808 = vsel %vm805, %v807, %v803
        %v809 = vmul.f32 %v567, %v808
        %v810 = vrcp.pop %v584
        %v811 = vmul.f32 %v584, %v810
        %v812 = vsub.f32 1.0, %v811
        %v813 = vmul.f32 %v810, %v812
        %v814 = vadd.f32 %v810, %v813
        %vm815 = vweird.f32 %v584
        %vm816 = vweird.f32 %v810
        %vm817 = vmor %vm815, %vm816
        %v818 = vsel %vm817, %v810, %v814
        %v819 = vand.u32 2147483647, %v584
        %vm820 = vcmp.eq.f32.partialorder %v819, 8.507059e+37
        %v821 = vand.u32 %v584, 2147483648
        %v822 = vor.u32 1.1754944e-38, %v821
        %v823 = vsel %vm820, %v822, %v818
        %v824 = vmul.f32 %v568, %v823
        %v825 = vlog2.pop %v599
        %v826 = vmul.f32 %v825, 0.6931472
        %v827 = vlog2.pop %v614
        %v828 = vmul.f32 %v827, 0.6931472
        %v829 = vlog2.pop %v629
        %v830 = vmul.f32 %v829, 0.6931472
        %v831 = vlog2.pop %v644
        %v832 = vmul.f32 %v831, 0.6931472
        %v833 = vlog2.pop %v659
        %v834 = vmul.f32 %v833, 0.6931472
        %v835 = vlog2.pop %v674
        %v836 = vmul.f32 %v835, 0.6931472
        %v837 = vlog2.pop %v689
        %v838 = vmul.f32 %v837, 0.6931472
        %v839 = vlog2.pop %v704
        %v840 = vmul.f32 %v839, 0.6931472
        %v841 = vlog2.pop %v719
        %v842 = vmul.f32 %v841, 0.6931472
        %v843 = vlog2.pop %v734
        %v844 = vmul.f32 %v843, 0.6931472
        %v845 = vlog2.pop %v749
        %v846 = vmul.f32 %v845, 0.6931472
        %v847 = vlog2.pop %v764
        %v848 = vmul.f32 %v847, 0.6931472
        %v849 = vlog2.pop %v779
        %v850 = vmul.f32 %v849, 0.6931472
        %v851 = vlog2.pop %v794
        %v852 = vmul.f32 %v851, 0.6931472
        %v853 = vlog2.pop %v809
        %v854 = vmul.f32 %v853, 0.6931472
        %v855 = vlog2.pop %v824
        %v856 = vmul.f32 %v855, 0.6931472
        %v857 = vmul.f32 %v826, 0.5
        %v858 = vmul.f32 %v828, 0.5
        %v859 = vmul.f32 %v830, 0.5
        %v860 = vmul.f32 %v832, 0.5
        %v861 = vmul.f32 %v834, 0.5
        %v862 = vmul.f32 %v836, 0.5
        %v863 = vmul.f32 %v838, 0.5
        %v864 = vmul.f32 %v840, 0.5
        %v865 = vmul.f32 %v842, 0.5
        %v866 = vmul.f32 %v844, 0.5
        %v867 = vmul.f32 %v846, 0.5
        %v868 = vmul.f32 %v848, 0.5
        %v869 = vmul.f32 %v850, 0.5
        %v870 = vmul.f32 %v852, 0.5
        %v871 = vmul.f32 %v854, 0.5
        %v872 = vmul.f32 %v856, 0.5
        %v873 = vrcp.pop %v505
        %v874 = vmul.f32 %v505, %v873
        %v875 = vsub.f32 1.0, %v874
        %v876 = vmul.f32 %v873, %v875
        %v877 = vadd.f32 %v873, %v876
        %vm878 = vweird.f32 %v505
        %vm879 = vweird.f32 %v873
        %vm880 = vmor %vm878, %vm879
        %v881 = vsel %vm880, %v873, %v877
        %v882 = vand.u32 2147483647, %v505
        %vm883 = vcmp.eq.f32.partialorder %v882, 8.507059e+37
        %v884 = vand.u32 %v505, 2147483648
        %v885 = vor.u32 1.1754944e-38, %v884
        %v886 = vsel %vm883, %v885, %v881
        %v887 = vmul.f32 %v857, %v886
        %v888 = vrcp.pop %v506
        %v889 = vmul.f32 %v506, %v888
        %v890 = vsub.f32 1.0, %v889
        %v891 = vmul.f32 %v888, %v890
        %v892 = vadd.f32 %v888, %v891
        %vm893 = vweird.f32 %v506
        %vm894 = vweird.f32 %v888
        %vm895 = vmor %vm893, %vm894
        %v896 = vsel %vm895, %v888, %v892
        %v897 = vand.u32 2147483647, %v506
        %vm898 = vcmp.eq.f32.partialorder %v897, 8.507059e+37
        %v899 = vand.u32 %v506, 2147483648
        %v900 = vor.u32 1.1754944e-38, %v899
        %v901 = vsel %vm898, %v900, %v896
        %v902 = vmul.f32 %v858, %v901
        %v903 = vrcp.pop %v507
        %v904 = vmul.f32 %v507, %v903
        %v905 = vsub.f32 1.0, %v904
        %v906 = vmul.f32 %v903, %v905
        %v907 = vadd.f32 %v903, %v906
        %vm908 = vweird.f32 %v507
        %vm909 = vweird.f32 %v903
        %vm910 = vmor %vm908, %vm909
        %v911 = vsel %vm910, %v903, %v907
        %v912 = vand.u32 2147483647, %v507
        %vm913 = vcmp.eq.f32.partialorder %v912, 8.507059e+37
        %v914 = vand.u32 %v507, 2147483648
        %v915 = vor.u32 1.1754944e-38, %v914
        %v916 = vsel %vm913, %v915, %v911
        %v917 = vmul.f32 %v859, %v916
        %v918 = vrcp.pop %v508
        %v919 = vmul.f32 %v508, %v918
        %v920 = vsub.f32 1.0, %v919
        %v921 = vmul.f32 %v918, %v920
        %v922 = vadd.f32 %v918, %v921
        %vm923 = vweird.f32 %v508
        %vm924 = vweird.f32 %v918
        %vm925 = vmor %vm923, %vm924
        %v926 = vsel %vm925, %v918, %v922
        %v927 = vand.u32 2147483647, %v508
        %vm928 = vcmp.eq.f32.partialorder %v927, 8.507059e+37
        %v929 = vand.u32 %v508, 2147483648
        %v930 = vor.u32 1.1754944e-38, %v929
        %v931 = vsel %vm928, %v930, %v926
        %v932 = vmul.f32 %v860, %v931
        %v933 = vrcp.pop %v509
        %v934 = vmul.f32 %v509, %v933
        %v935 = vsub.f32 1.0, %v934
        %v936 = vmul.f32 %v933, %v935
        %v937 = vadd.f32 %v933, %v936
        %vm938 = vweird.f32 %v509
        %vm939 = vweird.f32 %v933
        %vm940 = vmor %vm938, %vm939
        %v941 = vsel %vm940, %v933, %v937
        %v942 = vand.u32 2147483647, %v509
        %vm943 = vcmp.eq.f32.partialorder %v942, 8.507059e+37
        %v944 = vand.u32 %v509, 2147483648
        %v945 = vor.u32 1.1754944e-38, %v944
        %v946 = vsel %vm943, %v945, %v941
        %v947 = vmul.f32 %v861, %v946
        %v948 = vrcp.pop %v510
        %v949 = vmul.f32 %v510, %v948
        %v950 = vsub.f32 1.0, %v949
        %v951 = vmul.f32 %v948, %v950
        %v952 = vadd.f32 %v948, %v951
        %vm953 = vweird.f32 %v510
        %vm954 = vweird.f32 %v948
        %vm955 = vmor %vm953, %vm954
        %v956 = vsel %vm955, %v948, %v952
        %v957 = vand.u32 2147483647, %v510
        %vm958 = vcmp.eq.f32.partialorder %v957, 8.507059e+37
        %v959 = vand.u32 %v510, 2147483648
        %v960 = vor.u32 1.1754944e-38, %v959
        %v961 = vsel %vm958, %v960, %v956
        %v962 = vmul.f32 %v862, %v961
        %v963 = vrcp.pop %v511
        %v964 = vmul.f32 %v511, %v963
        %v965 = vsub.f32 1.0, %v964
        %v966 = vmul.f32 %v963, %v965
        %v967 = vadd.f32 %v963, %v966
        %vm968 = vweird.f32 %v511
        %vm969 = vweird.f32 %v963
        %vm970 = vmor %vm968, %vm969
        %v971 = vsel %vm970, %v963, %v967
        %v972 = vand.u32 2147483647, %v511
        %vm973 = vcmp.eq.f32.partialorder %v972, 8.507059e+37
        %v974 = vand.u32 %v511, 2147483648
        %v975 = vor.u32 1.1754944e-38, %v974
        %v976 = vsel %vm973, %v975, %v971
        %v977 = vmul.f32 %v863, %v976
        %v978 = vrcp.pop %v512
        %v979 = vmul.f32 %v512, %v978
        %v980 = vsub.f32 1.0, %v979
        %v981 = vmul.f32 %v978, %v980
        %v982 = vadd.f32 %v978, %v981
        %vm983 = vweird.f32 %v512
        %vm984 = vweird.f32 %v978
        %vm985 = vmor %vm983, %vm984
        %v986 = vsel %vm985, %v978, %v982
        %v987 = vand.u32 2147483647, %v512
        %vm988 = vcmp.eq.f32.partialorder %v987, 8.507059e+37
        %v989 = vand.u32 %v512, 2147483648
        %v990 = vor.u32 1.1754944e-38, %v989
        %v991 = vsel %vm988, %v990, %v986
        %v992 = vmul.f32 %v864, %v991
        %v993 = vrcp.pop %v513
        %v994 = vmul.f32 %v513, %v993
        %v995 = vsub.f32 1.0, %v994
        %v996 = vmul.f32 %v993, %v995
        %v997 = vadd.f32 %v993, %v996
        %vm998 = vweird.f32 %v513
        %vm999 = vweird.f32 %v993
        %vm1000 = vmor %vm998, %vm999
        %v1001 = vsel %vm1000, %v993, %v997
        %v1002 = vand.u32 2147483647, %v513
        %vm1003 = vcmp.eq.f32.partialorder %v1002, 8.507059e+37
        %v1004 = vand.u32 %v513, 2147483648
        %v1005 = vor.u32 1.1754944e-38, %v1004
        %v1006 = vsel %vm1003, %v1005, %v1001
        %v1007 = vmul.f32 %v865, %v1006
        %v1008 = vrcp.pop %v514
        %v1009 = vmul.f32 %v514, %v1008
        %v1010 = vsub.f32 1.0, %v1009
        %v1011 = vmul.f32 %v1008, %v1010
        %v1012 = vadd.f32 %v1008, %v1011
        %vm1013 = vweird.f32 %v514
        %vm1014 = vweird.f32 %v1008
        %vm1015 = vmor %vm1013, %vm1014
        %v1016 = vsel %vm1015, %v1008, %v1012
        %v1017 = vand.u32 2147483647, %v514
        %vm1018 = vcmp.eq.f32.partialorder %v1017, 8.507059e+37
        %v1019 = vand.u32 %v514, 2147483648
        %v1020 = vor.u32 1.1754944e-38, %v1019
        %v1021 = vsel %vm1018, %v1020, %v1016
        %v1022 = vmul.f32 %v866, %v1021
        %v1023 = vrcp.pop %v515
        %v1024 = vmul.f32 %v515, %v1023
        %v1025 = vsub.f32 1.0, %v1024
        %v1026 = vmul.f32 %v1023, %v1025
        %v1027 = vadd.f32 %v1023, %v1026
        %vm1028 = vweird.f32 %v515
        %vm1029 = vweird.f32 %v1023
        %vm1030 = vmor %vm1028, %vm1029
        %v1031 = vsel %vm1030, %v1023, %v1027
        %v1032 = vand.u32 2147483647, %v515
        %vm1033 = vcmp.eq.f32.partialorder %v1032, 8.507059e+37
        %v1034 = vand.u32 %v515, 2147483648
        %v1035 = vor.u32 1.1754944e-38, %v1034
        %v1036 = vsel %vm1033, %v1035, %v1031
        %v1037 = vmul.f32 %v867, %v1036
        %v1038 = vrcp.pop %v516
        %v1039 = vmul.f32 %v516, %v1038
        %v1040 = vsub.f32 1.0, %v1039
        %v1041 = vmul.f32 %v1038, %v1040
        %v1042 = vadd.f32 %v1038, %v1041
        %vm1043 = vweird.f32 %v516
        %vm1044 = vweird.f32 %v1038
        %vm1045 = vmor %vm1043, %vm1044
        %v1046 = vsel %vm1045, %v1038, %v1042
        %v1047 = vand.u32 2147483647, %v516
        %vm1048 = vcmp.eq.f32.partialorder %v1047, 8.507059e+37
        %v1049 = vand.u32 %v516, 2147483648
        %v1050 = vor.u32 1.1754944e-38, %v1049
        %v1051 = vsel %vm1048, %v1050, %v1046
        %v1052 = vmul.f32 %v868, %v1051
        %v1053 = vrcp.pop %v517
        %v1054 = vmul.f32 %v517, %v1053
        %v1055 = vsub.f32 1.0, %v1054
        %v1056 = vmul.f32 %v1053, %v1055
        %v1057 = vadd.f32 %v1053, %v1056
        %vm1058 = vweird.f32 %v517
        %vm1059 = vweird.f32 %v1053
        %vm1060 = vmor %vm1058, %vm1059
        %v1061 = vsel %vm1060, %v1053, %v1057
        %v1062 = vand.u32 2147483647, %v517
        %vm1063 = vcmp.eq.f32.partialorder %v1062, 8.507059e+37
        %v1064 = vand.u32 %v517, 2147483648
        %v1065 = vor.u32 1.1754944e-38, %v1064
        %v1066 = vsel %vm1063, %v1065, %v1061
        %v1067 = vmul.f32 %v869, %v1066
        %v1068 = vrcp.pop %v518
        %v1069 = vmul.f32 %v518, %v1068
        %v1070 = vsub.f32 1.0, %v1069
        %v1071 = vmul.f32 %v1068, %v1070
        %v1072 = vadd.f32 %v1068, %v1071
        %vm1073 = vweird.f32 %v518
        %vm1074 = vweird.f32 %v1068
        %vm1075 = vmor %vm1073, %vm1074
        %v1076 = vsel %vm1075, %v1068, %v1072
        %v1077 = vand.u32 2147483647, %v518
        %vm1078 = vcmp.eq.f32.partialorder %v1077, 8.507059e+37
        %v1079 = vand.u32 %v518, 2147483648
        %v1080 = vor.u32 1.1754944e-38, %v1079
        %v1081 = vsel %vm1078, %v1080, %v1076
        %v1082 = vmul.f32 %v870, %v1081
        %v1083 = vrcp.pop %v519
        %v1084 = vmul.f32 %v519, %v1083
        %v1085 = vsub.f32 1.0, %v1084
        %v1086 = vmul.f32 %v1083, %v1085
        %v1087 = vadd.f32 %v1083, %v1086
        %vm1088 = vweird.f32 %v519
        %vm1089 = vweird.f32 %v1083
        %vm1090 = vmor %vm1088, %vm1089
        %v1091 = vsel %vm1090, %v1083, %v1087
        %v1092 = vand.u32 2147483647, %v519
        %vm1093 = vcmp.eq.f32.partialorder %v1092, 8.507059e+37
        %v1094 = vand.u32 %v519, 2147483648
        %v1095 = vor.u32 1.1754944e-38, %v1094
        %v1096 = vsel %vm1093, %v1095, %v1091
        %v1097 = vmul.f32 %v871, %v1096
        %v1098 = vrcp.pop %v520
        %v1099 = vmul.f32 %v520, %v1098
        %v1100 = vsub.f32 1.0, %v1099
        %v1101 = vmul.f32 %v1098, %v1100
        %v1102 = vadd.f32 %v1098, %v1101
        %vm1103 = vweird.f32 %v520
        %vm1104 = vweird.f32 %v1098
        %vm1105 = vmor %vm1103, %vm1104
        %v1106 = vsel %vm1105, %v1098, %v1102
        %v1107 = vand.u32 2147483647, %v520
        %vm1108 = vcmp.eq.f32.partialorder %v1107, 8.507059e+37
        %v1109 = vand.u32 %v520, 2147483648
        %v1110 = vor.u32 1.1754944e-38, %v1109
        %v1111 = vsel %vm1108, %v1110, %v1106
        %v1112 = vmul.f32 %v872, %v1111
        %v1113 = vmul.f32 %v887, %v282
        %v1114 = vmul.f32 %v902, %v284
        %v1115 = vmul.f32 %v917, %v286
        %v1116 = vmul.f32 %v932, %v288
        %v1117 = vmul.f32 %v947, %v290
        %v1118 = vmul.f32 %v962, %v292
        %v1119 = vmul.f32 %v977, %v294
        %v1120 = vmul.f32 %v992, %v296
        %v1121 = vmul.f32 %v1007, %v298
        %v1122 = vmul.f32 %v1022, %v300
        %v1123 = vmul.f32 %v1037, %v302
        %v1124 = vmul.f32 %v1052, %v304
        %v1125 = vmul.f32 %v1067, %v306
        %v1126 = vmul.f32 %v1082, %v308
        %v1127 = vmul.f32 %v1097, %v310
        %v1128 = vmul.f32 %v1112, %v312
        %v1129 = vstv %s213
        %v1130 = vadd.f32 %v1113, %v1129
        %v1131 = vadd.f32 %v1114, %v1129
        %v1132 = vadd.f32 %v1115, %v1129
        %v1133 = vadd.f32 %v1116, %v1129
        %v1134 = vadd.f32 %v1117, %v1129
        %v1135 = vadd.f32 %v1118, %v1129
        %v1136 = vadd.f32 %v1119, %v1129
        %v1137 = vadd.f32 %v1120, %v1129
        %v1138 = vadd.f32 %v1121, %v1129
        %v1139 = vadd.f32 %v1122, %v1129
        %v1140 = vadd.f32 %v1123, %v1129
        %v1141 = vadd.f32 %v1124, %v1129
        %v1142 = vadd.f32 %v1125, %v1129
        %v1143 = vadd.f32 %v1126, %v1129
        %v1144 = vadd.f32 %v1127, %v1129
        %v1145 = vadd.f32 %v1128, %v1129
        %v1146 = vmax.f32 %v1130, 0.0
        %v1147 = vmax.f32 %v1131, 0.0
        %v1148 = vmax.f32 %v1132, 0.0
        %v1149 = vmax.f32 %v1133, 0.0
        %v1150 = vmax.f32 %v1134, 0.0
        %v1151 = vmax.f32 %v1135, 0.0
        %v1152 = vmax.f32 %v1136, 0.0
        %v1153 = vmax.f32 %v1137, 0.0
        %v1154 = vmax.f32 %v1138, 0.0
        %v1155 = vmax.f32 %v1139, 0.0
        %v1156 = vmax.f32 %v1140, 0.0
        %v1157 = vmax.f32 %v1141, 0.0
        %v1158 = vmax.f32 %v1142, 0.0
        %v1159 = vmax.f32 %v1143, 0.0
        %v1160 = vmax.f32 %v1144, 0.0
        %v1161 = vmax.f32 %v1145, 0.0
        %vm1162 = vcmask 7168
        %1163 = vst.msk [vmem:[%s194] sm:$0xff] %vm1162, %v1146
        %1164 = vst.msk [vmem:[%s194 + $0x8] sm:$0xff] %vm1162, %v1147
        %1165 = vst.msk [vmem:[%s194 + $0x10] sm:$0xff] %vm1162, %v1148
        %1166 = vst.msk [vmem:[%s194 + $0x18] sm:$0xff] %vm1162, %v1149
        %1167 = vst.msk [vmem:[%s194 + $0x20] sm:$0xff] %vm1162, %v1150
        %1168 = vst.msk [vmem:[%s194 + $0x28] sm:$0xff] %vm1162, %v1151
        %1169 = vst.msk [vmem:[%s194 + $0x30] sm:$0xff] %vm1162, %v1152
        %1170 = vst.msk [vmem:[%s194 + $0x38] sm:$0xff] %vm1162, %v1153
        %1171 = vst.msk [vmem:[%s194 + $0x40] sm:$0xff] %vm1162, %v1154
        %1172 = vst.msk [vmem:[%s194 + $0x48] sm:$0xff] %vm1162, %v1155
        %1173 = vst.msk [vmem:[%s194 + $0x50] sm:$0xff] %vm1162, %v1156
        %1174 = vst.msk [vmem:[%s194 + $0x58] sm:$0xff] %vm1162, %v1157
        %1175 = vst.msk [vmem:[%s194 + $0x60] sm:$0xff] %vm1162, %v1158
        %1176 = vst.msk [vmem:[%s194 + $0x68] sm:$0xff] %vm1162, %v1159
        %1177 = vst.msk [vmem:[%s194 + $0x70] sm:$0xff] %vm1162, %v1160
        %1178 = vst.msk [vmem:[%s194 + $0x78] sm:$0xff] %vm1162, %v1161
        %s1179 = smul.u32 16, %s18
        %p1180 = scmp.lt.s32.totalorder %s1179, 31
        %s1181 = scalar_select %p1180, %s1179, 31
        %s1182 = smul.addr %s1181, 8
        %s1183 = scalar_lea.vmem %s3, %s1182
        // Predicated region
        $region37: #{tpu_custom_call.1} parent=31 // pred_check
          %p1184 = pneg %p104
        $region38: #{tpu_custom_call.1} parent=31 // pred_check_branch
          %1186 = sbr.rel (%p1184) target = $region40
        $region39: #{tpu_custom_call.1} parent=31 // pred_region
          %s1187 = smul.u32 16, %s18
        $region40: #{tpu_custom_call.1} parent=31 // pred_fallthru
          _
      $region32: #{tpu_custom_call.1} parent=5 // pred_fallthru
        _
      %p1188 = scmp.le.s32.totalorder 2, %s13
      // Predicated region
      $region41: #{tpu_custom_call.1} parent=5 // pred_check
        %p1189 = pneg %p1188
      $region42: #{tpu_custom_call.1} parent=5 // pred_check_branch
        %1191 = sbr.rel (%p1189) target = $region44
      $region43: #{tpu_custom_call.1} parent=5 // pred_region
        %s1192 = ssub.s32 %s13, 2
        // Predicated region
        $region45: #{tpu_custom_call.1} parent=43 // pred_check
          %p1193 = pneg %p110
        $region46: #{tpu_custom_call.1} parent=43 // pred_check_branch
          %1195 = sbr.rel (%p1193) target = $region48
        $region47: #{tpu_custom_call.1} parent=43 // pred_region
          %s1196 = smul.u32 16, %s19
          %p1197 = scmp.lt.s32.totalorder %s1196, 31
          %s1198 = scalar_select %p1197, %s1196, 31
          %s1199 = smul.addr %s1198, 8
          %s1200 = scalar_lea.vmem %s3, %s1199
        $region48: #{tpu_custom_call.1} parent=43 // pred_fallthru
          _
      $region44: #{tpu_custom_call.1} parent=5 // pred_fallthru
        _
    $region6: #{tpu_custom_call.1} parent=1 // loop_footer
      %s17 = sadd.s32 1, %s13
    $region7: #{tpu_custom_call.1} parent=1 // loop_footer_branch
      %12 = sbr.rel target = $region3
    $region8: #{tpu_custom_call.1} parent=1 // loop_exit
      _
    %1201 = vsyncpa [#allocation4], 1
    %s1202 = scalar_lea.sflag [#allocation4], 1
    %1203 = vsyncpa %s1202, 1

</llo_original>
